<compile_context>
chip_gen: v7x
topology: tpu7x:2x2x1
jax: 0.10.0
libtpu: 0.0.40
codegen_flags: <defaults>
</compile_context>

<pallas_src>
import functools
import math

import jax
import jax.numpy as jnp
from jax.experimental import pallas as pl
from jax.experimental.pallas import tpu as pltpu


def _label_smoothing_kernel(x_ref, tgt_ref, out_ref, *, confidence, smooth_val):
    # x_ref: (TN, C) probabilities (f32/bf16); tgt_ref: (TN, 1) int32 labels.
    logx = jnp.log(x_ref[...].astype(jnp.float32))               # EUP: 1/elem
    col = jax.lax.broadcasted_iota(jnp.int32, logx.shape, 1)     # lane iota
    w = jnp.where(col == tgt_ref[...],                           # VALU cmp+sel
                  jnp.float32(confidence), jnp.float32(smooth_val))
    term = w * logx                                              # VALU mul
    tn, c = logx.shape
    # Fold sublane-groups of 8 rows on top of each other: pure vreg adds
    # (layout-preserving reshape for the native (8,128) f32 tiling).
    out_ref[...] = jnp.sum(term.reshape(tn // 8, 8, c), axis=0)


def label_smoothing_loss(x, target, *, size, smoothing=0.0, tile_n=None):
    """KLDivLoss(size_average=False)(log(x), smoothed_one_hot(target)) -> scalar f32.

    x: (N, size) probabilities (f32 or bf16); target: (N,) integer labels.
    """
    N, C = x.shape
    assert C == size, "x.shape[1] must equal `size`"
    assert size > 1 or smoothing == 0.0, "smoothing/(size-1) ill-defined for size==1"

    confidence = 1.0 - smoothing
    smooth_val = smoothing / (size - 1) if size > 1 else 0.0

    # Per-row constant  sum_c y*log(y)  (y has only two distinct values; 0*log0=0).
    def _xlogx(v):
        return 0.0 if v == 0.0 else v * math.log(v)
    row_const = _xlogx(confidence) + (size - 1) * _xlogx(smooth_val)

    itemsize = jnp.dtype(x.dtype).itemsize
    n_pad8 = ((N + 7) // 8) * 8

    # ---- tiling: ~4 MiB input blocks (HBM roofline plateau), then shrink until
    # the full working set — double-buffered I/O *plus* the f32 elementwise
    # intermediates (logx / weights / products) the compiler materializes —
    # fits a conservative VMEM cap (v7x has only 64 MiB physical VMEM).
    if tile_n is None:
        target_bytes = 4 * 1024 * 1024
        tile_n = max(8, (target_bytes // max(1, C * itemsize)) // 8 * 8)
    tile_n = int(max(8, min(tile_n, n_pad8)))
    assert tile_n % 8 == 0

    vmem_cap = 44 * 1024 * 1024

    def _vmem_est(tn):
        in_x = 2 * tn * C * itemsize        # double-buffered x blocks
        in_t = 2 * tn * 4                   # double-buffered target blocks
        out = 2 * 8 * C * 4                 # double-buffered output slabs
        tmp = 3 * tn * C * 4                # f32 intermediates inside the kernel
        return in_x + in_t + out + tmp + (2 << 20)

    while tile_n > 8 and _vmem_est(tile_n) > vmem_cap:
        tile_n = max(8, (tile_n // 2) // 8 * 8)

    num_tiles = -(-n_pad8 // tile_n)
    n_total = num_tiles * tile_n

    # Pad rows with x == 1 (log x == 0) so they contribute exactly 0; no masking.
    if n_total != N:
        x = jnp.concatenate([x, jnp.ones((n_total - N, C), dtype=x.dtype)], axis=0)
        target = jnp.concatenate(
            [target, jnp.zeros((n_total - N,), dtype=target.dtype)], axis=0)
    tgt2d = target.reshape(n_total, 1).astype(jnp.int32)

    kernel = functools.partial(_label_smoothing_kernel,
                               confidence=confidence, smooth_val=smooth_val)

    cost = pl.CostEstimate(
        flops=int(4 * n_total * C),
        transcendentals=int(n_total * C),
        bytes_accessed=int(n_total * C * itemsize + n_total * 4
                           + num_tiles * 8 * C * 4),
    )

    partials = pl.pallas_call(
        kernel,
        out_shape=jax.ShapeDtypeStruct((num_tiles * 8, C), jnp.float32),
        grid=(num_tiles,),
        in_specs=[
            pl.BlockSpec((tile_n, C), lambda i: (i, 0)),
            pl.BlockSpec((tile_n, 1), lambda i: (i, 0)),
        ],
        out_specs=pl.BlockSpec((8, C), lambda i: (i, 0)),
        compiler_params=pltpu.CompilerParams(
            dimension_semantics=("parallel",),   # independent tiles -> both TCs
            vmem_limit_bytes=int(min(vmem_cap, max(_vmem_est(tile_n), 16 << 20))),
        ),
        cost_estimate=cost,
    )(x, tgt2d)

    # loss = N * sum_c y*log(y)  -  sum_{n,c} y*log(x)
    return jnp.float32(N * row_const) - jnp.sum(partials)


def _reference(x, target, size, smoothing):
    # Plain-JAX reference mirroring the PyTorch module (kl_div, sum reduction).
    logx = jnp.log(x.astype(jnp.float32))
    confidence = 1.0 - smoothing
    smooth_val = smoothing / (size - 1)
    onehot = jax.nn.one_hot(target, size, dtype=jnp.float32)
    true_dist = onehot * confidence + (1.0 - onehot) * smooth_val
    safe_y = jnp.where(true_dist > 0.0, true_dist, 1.0)
    term = jnp.where(true_dist > 0.0, true_dist * (jnp.log(safe_y) - logx), 0.0)
    return jnp.sum(term)


# TODO(synk): the module's side effects (`self.true_dist` caching, print) are
# not reproduced; only the returned loss (forward semantics) is implemented.

if __name__ == "__main__":
    N = 8          # number of samples
    SIZE = 128     # number of classes (module's `size`)
    SMOOTHING = 0.1

    key = jax.random.PRNGKey(0)
    kx, kt = jax.random.split(key)
    logits = jax.random.normal(kx, (N, SIZE), dtype=jnp.float32)
    x = jax.nn.softmax(logits, axis=-1)   # probabilities (module logs them itself)
    target = jax.random.randint(kt, (N,), 0, SIZE, dtype=jnp.int32)

    loss = label_smoothing_loss(x, target, size=SIZE, smoothing=SMOOTHING)
    loss = jax.block_until_ready(loss)

    ref = _reference(x, target, SIZE, SMOOTHING)
    assert jnp.allclose(loss, ref, rtol=1e-5, atol=1e-4), (loss, ref)

    print("KERNEL_OK")
</pallas_src>

<mosaic_0001>
module attributes {stable_mosaic.version = 11 : i64} {
  func.func @_label_smoothing_kernel(%arg0: i32, %arg1: memref<8x128xf32, #tpu.memory_space<vmem>>, %arg2: memref<8x1xi32, #tpu.memory_space<vmem>>, %arg3: memref<8x128xf32, #tpu.memory_space<vmem>>) attributes {dimension_semantics = [#tpu.dimension_semantics<parallel>], iteration_bounds = array<i64: 1>, scalar_prefetch = 0 : i64, scratch_operands = 0 : i64, tpu.core_type = #tpu.core_type<tc>, window_params = [{transform_indices = @transform_0, window_bounds = array<i64: 8, 128>}, {transform_indices = @transform_1, window_bounds = array<i64: 8, 1>}, {transform_indices = @transform_2, window_bounds = array<i64: 8, 128>}]} {
    %c0 = arith.constant 0 : index
    %c0_0 = arith.constant 0 : index
    %0 = vector.load %arg1[%c0, %c0_0] : memref<8x128xf32, #tpu.memory_space<vmem>>, vector<8x128xf32>
    %1 = math.log %0 : vector<8x128xf32>
    %2 = tpu.iota {dimensions = array<i32: 1>} : vector<8x128xi32>
    %c0_1 = arith.constant 0 : index
    %c0_2 = arith.constant 0 : index
    %3 = vector.load %arg2[%c0_1, %c0_2] : memref<8x1xi32, #tpu.memory_space<vmem>>, vector<8x1xi32>
    %4 = vector.broadcast %3 : vector<8x1xi32> to vector<8x128xi32>
    %5 = arith.cmpi eq, %2, %4 : vector<8x128xi32>
    %cst = arith.constant 0.899999976 : f32
    %cst_3 = arith.constant 7.87401571E-4 : f32
    %6 = vector.broadcast %cst : f32 to vector<8x128xf32>
    %7 = vector.broadcast %cst_3 : f32 to vector<8x128xf32>
    %8 = arith.select %5, %6, %7 : vector<8x128xi1>, vector<8x128xf32>
    %9 = arith.mulf %8, %1 : vector<8x128xf32>
    %10 = vector.shape_cast %9 : vector<8x128xf32> to vector<1x8x128xf32>
    %cst_4 = arith.constant dense<0.000000e+00> : vector<8x128xf32>
    %11 = vector.multi_reduction <add>, %10, %cst_4 [0] : vector<1x8x128xf32> to vector<8x128xf32>
    %c0_5 = arith.constant 0 : index
    %c0_6 = arith.constant 0 : index
    %12 = vector.load %arg3[%c0_5, %c0_6] : memref<8x128xf32, #tpu.memory_space<vmem>>, vector<8x128xf32>
    tpu.vector_store %arg3[%c0_5, %c0_6], %11 {strides = array<i32>} : memref<8x128xf32, #tpu.memory_space<vmem>>, vector<8x128xf32>,
    return
  }
  func.func @transform_0(%arg0: i32) -> (i32, i32) {
    %c0_i32 = arith.constant 0 : i32
    %c0_i32_0 = arith.constant 0 : i32
    return %arg0, %c0_i32 : i32, i32
  }
  func.func @transform_1(%arg0: i32) -> (i32, i32) {
    %c0_i32 = arith.constant 0 : i32
    %c0_i32_0 = arith.constant 0 : i32
    return %arg0, %c0_i32 : i32, i32
  }
  func.func @transform_2(%arg0: i32) -> (i32, i32) {
    %c0_i32 = arith.constant 0 : i32
    %c0_i32_0 = arith.constant 0 : i32
    return %arg0, %c0_i32 : i32, i32
  }
}

</mosaic_0001>

<llo_original>
// kernel: tpu_custom_call.1
$region0: #{tpu_custom_call.1}
  #allocation0 [shape = 'u32[]', space=smem, size = 0x4, offset = 0x4, fixed_abs, tag = 'smem constant byte address 0x4 - core index']
  #allocation1 [shape = 'u32[144,128]{1,0:T(1,128)}', space=vmem, size = 0x12000, scoped, tag = 'internal scratch']
  %s0 = inlined_call_operand.vmem [shape: f32[8,128], index: 0, kind: input, shape index: {}]
  %s1 = inlined_call_operand.vmem [shape: s32[8,1], index: 1, kind: input, shape index: {}]
  %s2 = inlined_call_operand.hbm [shape: f32[8,128], index: 2, kind: output, shape index: {}]
  %s3 = sld [smem:[#allocation0]]
  $region18: #{tpu_custom_call.1} parent=0
    _
  %s5 = ssub.s32 1, %s3
  %s6 = scalar_select 0, %s5, %s3
  $region1: #{tpu_custom_call.1} parent=0
    #allocation2 [shape = 'u8[4096]{0}', space=vmem, size = 0x1000, scoped, tag = 'output window, operand 0, single buffered']
    #allocation3 [shape = 's32[1]{0}', space=sflag, size = 0x4, scoped, tag = 'scoped memory for tpu_custom_call.1']
    %7 = vsyncpa [#allocation3], 0
    // Predicated region
    $region2: #{tpu_custom_call.1} parent=1 // pred_check
      _
    $region3: #{tpu_custom_call.1} parent=1 // pred_check_branch
      %9 = sbr.rel (0) target = $region5
    $region4: #{tpu_custom_call.1} parent=1 // pred_region
      _
    $region5: #{tpu_custom_call.1} parent=1 // pred_fallthru
      _
    // Predicated region
    $region6: #{tpu_custom_call.1} parent=1 // pred_check
      _
    $region7: #{tpu_custom_call.1} parent=1 // pred_check_branch
      %11 = sbr.rel (0) target = $region9
    $region8: #{tpu_custom_call.1} parent=1 // pred_region
      _
    $region9: #{tpu_custom_call.1} parent=1 // pred_fallthru
      _
    %v12 = vld [vmem:[%s0] sm:$0xff]
    %v13 = vlog2.pop %v12
    %v14 = vmul.f32 %v13, 0.6931472
    %v15 = vlaneseq
    %v16 = vand.u32 %v15, 127
    %v17 = vld [vmem:[%s1] sm:$0xff]
    %18 = vset.pattern.permute.xlu0 0
    %19 = vperm.xlu0 %18, %v17
    %v20 = vpop.permute.xlu0 %19
    %vm21 = vcmp.eq.s32.totalorder %v16, %v20
    %v22 = vsel %vm21, 0.9, 0.0007874016
    %v23 = vmul.f32 %v22, %v14
    %v24 = vadd.f32 %v23, 0.0
    %25 = vst [vmem:[#allocation2] sm:$0xff] %v24
    // Predicated region
    $region10: #{tpu_custom_call.1} parent=1 // pred_check
      _
    $region11: #{tpu_custom_call.1} parent=1 // pred_check_branch
      %27 = sbr.rel (0) target = $region13
    $region12: #{tpu_custom_call.1} parent=1 // pred_region
      %s29 = ssub.s32 128, 128
      %30 = vsyncadd [#allocation3], %s29
      %s32 = sshll.u32 [#allocation2], 4
      %s33 = int_to_ptr.vmem [resolvable:$true] %s32
      %35 = dma.vmem_to_hbm [thread:$0]  %s33, 128, %s2, [#allocation3]
    $region13: #{tpu_custom_call.1} parent=1 // pred_fallthru
      _
    // Predicated region
    $region14: #{tpu_custom_call.1} parent=1 // pred_check
      _
    $region15: #{tpu_custom_call.1} parent=1 // pred_check_branch
      %37 = sbr.rel (0) target = $region17
    $region16: #{tpu_custom_call.1} parent=1 // pred_region
      %38 = dma.done [#allocation3], 128
    $region17: #{tpu_custom_call.1} parent=1 // pred_fallthru
      _
    %39 = vsyncpa [#allocation3], 1

</llo_original>
